<compile_context>
chip_gen: v7x
topology: tpu7x:2x2x1
jax: 0.10.0
libtpu: 0.0.40
codegen_flags: <defaults>
</compile_context>

<pallas_src>
import functools

import numpy as np

import jax
import jax.numpy as jnp
from jax import lax
from jax.experimental import pallas as pl
from jax.experimental.pallas import tpu as pltpu


# ---------------------------------------------------------------------------
# Trace-time operand transforms (tiny, weight-only JAX glue)
# ---------------------------------------------------------------------------

def _toeplitz_conv_weights(w_hwio, width):
    """Fold a 3x3 'SAME' conv along W into a merged-tap (3*W*Cin, W*Cout) matmul RHS.

    Contraction rows are ordered (ky, w_in, ci) to match an LHS whose lanes hold the three
    row-shifted copies [x[h-1] | x[h] | x[h+1]] of the (w, ci)-ordered input row.
    Output columns are parity-major: col = (w_out % 2) * (W//2 * Cout) + (w_out//2)*Cout + co,
    so a 2x-wide W max pool of the conv output is a max of two contiguous column halves.
    Zero padding at the W borders is encoded by leaving entries zero.
    """
    kh, kw, cin, cout = w_hwio.shape
    half = width // 2
    sel = np.zeros((kw, width, width), np.float32)        # [kx, w_in, col_slot]
    for kx in range(kw):
        for w_out in range(width):
            w_in = w_out + kx - (kw // 2)
            if 0 <= w_in < width:
                sel[kx, w_in, (w_out % 2) * half + (w_out // 2)] = 1.0
    t = jnp.einsum("kis,ykco->yicso", jnp.asarray(sel), w_hwio.astype(jnp.float32))
    return t.reshape(kh * width * cin, width * cout)      # rows (ky, w_in, ci)


def _fold_avgpool_flatten_fc(wfc, h2, w2, c2):
    """(AdaptiveAvgPool2d((2,2)) o NCHW-flatten o fc1) as one (h2*w2*c2, out) matrix.

    Rows are ordered (h2, w2, c2) to match the in-kernel pool2 layout; the NCHW flatten
    permutation and the 0.25 mean-pool weight are folded in.
    """
    ha, wa = h2 // 2, w2 // 2
    idx = np.empty((h2, w2, c2), np.int32)
    for i in range(h2):
        for j in range(w2):
            for c in range(c2):
                idx[i, j, c] = c * (ha * wa) + (i // 2) * wa + (j // 2)
    scale = 1.0 / ((h2 // ha) * (w2 // wa))               # 2x2 mean pool
    return scale * wfc[idx.reshape(-1), :]


# ---------------------------------------------------------------------------
# The fused Pallas kernel (one image per grid step)
# ---------------------------------------------------------------------------

def _fused_forward_kernel(x_ref, t1_ref, b1_ref, t2_ref, b2_ref, mfc_ref, bfc_ref,
                          o_ref,
                          xc1_ref, c1_ref, xc2_ref, c2_ref, p2_ref,
                          *, H, W, Cin, C1, C2):
    f32, bf16 = jnp.float32, jnp.bfloat16
    H1, W1 = H // 2, W // 2            # after pool1
    H2, W2 = H1 // 2, W1 // 2          # after pool2
    K0 = W * Cin                       # lanes of one conv1 tap
    K1 = W1 * C1                       # lanes of one conv2 tap
    half1 = W1 * C1                    # contiguous column half of conv1 output
    half2 = W2 * C2                    # contiguous column half of conv2 output

    # -- conv1 LHS: three row-shifted copies of the input concatenated along lanes -----
    # LHS row h (scratch row h+1) third ky holds x[h+ky-1]; only the 2 border sub-rows
    # are zeroed explicitly (no full zero-fill of the padded scratch).
    xv = x_ref[...].astype(f32)                                   # (H, W*Cin)
    xc1_ref[pl.ds(2, H), pl.ds(0, K0)] = xv                       # tap ky=0 -> x[h-1]
    xc1_ref[pl.ds(1, H), pl.ds(K0, K0)] = xv                      # tap ky=1 -> x[h]
    xc1_ref[pl.ds(0, H), pl.ds(2 * K0, K0)] = xv                  # tap ky=2 -> x[h+1]
    z0 = jnp.zeros((1, K0), f32)
    xc1_ref[pl.ds(1, 1), pl.ds(0, K0)] = z0                       # top border
    xc1_ref[pl.ds(H, 1), pl.ds(2 * K0, K0)] = z0                  # bottom border

    # -- conv1 (3x3, pad=1) + bias + ReLU: one (H, 3*K0) @ (3*K0, W*C1) MXU dot ---------
    a1 = jnp.dot(xc1_ref[pl.ds(1, H), :].astype(bf16), t1_ref[...],
                 preferred_element_type=f32)
    c1_ref[...] = jnp.maximum(a1 + b1_ref[...], 0.0)

    # -- pool1: 2x2 max via strided row loads + contiguous parity-major column halves --
    m1 = jnp.maximum(c1_ref[pl.ds(0, H1, stride=2), :],
                     c1_ref[pl.ds(1, H1, stride=2), :])
    p1 = jnp.maximum(m1[:, :half1], m1[:, half1:])                # (H1, W1*C1), lanes (w, c)

    # -- conv2 LHS (same shifted-copy construction) -------------------------------------
    xc2_ref[pl.ds(2, H1), pl.ds(0, K1)] = p1
    xc2_ref[pl.ds(1, H1), pl.ds(K1, K1)] = p1
    xc2_ref[pl.ds(0, H1), pl.ds(2 * K1, K1)] = p1
    z1 = jnp.zeros((1, K1), f32)
    xc2_ref[pl.ds(1, 1), pl.ds(0, K1)] = z1
    xc2_ref[pl.ds(H1, 1), pl.ds(2 * K1, K1)] = z1

    # -- conv2 (3x3, pad=1) + bias + ReLU ------------------------------------------------
    a2 = jnp.dot(xc2_ref[pl.ds(1, H1), :].astype(bf16), t2_ref[...],
                 preferred_element_type=f32)
    c2_ref[...] = jnp.maximum(a2 + b2_ref[...], 0.0)

    # -- pool2 ---------------------------------------------------------------------------
    m2 = jnp.maximum(c2_ref[pl.ds(0, H2, stride=2), :],
                     c2_ref[pl.ds(1, H2, stride=2), :])
    p2v = jnp.maximum(m2[:, :half2], m2[:, half2:])               # (H2, W2*C2)

    # lay pool2 out as a single lane-dense (1, H2*W2*C2) row, ordered (h2, w2, c2)
    for h2 in range(H2):
        p2_ref[pl.ds(0, 1), pl.ds(h2 * half2, half2)] = p2v[h2:h2 + 1, :]

    # -- folded (avgpool o NCHW-flatten o fc1): single (1, 256) @ (256, FC_OUT) dot ------
    y = jnp.dot(p2_ref[...].astype(bf16), mfc_ref[...],
                preferred_element_type=f32) + bfc_ref[...]
    o_ref[0] = y


# ---------------------------------------------------------------------------
# Wrapper
# ---------------------------------------------------------------------------

def feature_extractor_forward(x_nchw, params):
    B, Cin, H, W = x_nchw.shape
    C1 = params["w1"].shape[-1]
    C2 = params["w2"].shape[-1]
    FC_OUT = params["wfc"].shape[-1]
    H1, W1 = H // 2, W // 2
    H2, W2 = H1 // 2, W1 // 2

    # Layout assumptions of the fused kernel (even dims at every stage, 2x2 avgpool target).
    assert H % 4 == 0 and W % 4 == 0 and H2 % 2 == 0 and W2 % 2 == 0, "spatial dims"
    assert params["wfc"].shape[0] == C2 * 2 * 2, "fc1 input size"

    # bf16 MXU operands; accumulation / elementwise work stays f32 inside the kernel.
    x2d = (jnp.transpose(x_nchw, (0, 2, 3, 1))                     # rows (b,h), lanes (w,ci)
           .reshape(B * H, W * Cin).astype(jnp.bfloat16))
    t1 = _toeplitz_conv_weights(params["w1"], W).astype(jnp.bfloat16)    # (3*W*Cin,  W*C1)
    t2 = _toeplitz_conv_weights(params["w2"], W1).astype(jnp.bfloat16)   # (3*W1*C1, W1*C2)
    b1row = jnp.tile(params["b1"], W)[None, :].astype(jnp.float32)       # (1, W*C1)
    b2row = jnp.tile(params["b2"], W1)[None, :].astype(jnp.float32)      # (1, W1*C2)
    mfc = _fold_avgpool_flatten_fc(params["wfc"], H2, W2, C2).astype(jnp.bfloat16)
    bfcrow = params["bfc"][None, :].astype(jnp.float32)                  # (1, FC_OUT)

    kernel = functools.partial(_fused_forward_kernel, H=H, W=W, Cin=Cin, C1=C1, C2=C2)

    flops = 2 * B * (H * (3 * W * Cin) * (W * C1)
                     + H1 * (3 * W1 * C1) * (W1 * C2)
                     + (H2 * W2 * C2) * FC_OUT)
    bytes_accessed = int(2 * (x2d.size + t1.size + t2.size + mfc.size)
                         + 4 * (b1row.size + b2row.size + bfcrow.size + B * FC_OUT))

    grid_spec = pltpu.PrefetchScalarGridSpec(
        num_scalar_prefetch=0,
        grid=(B,),                                       # batch axis (megacore on v7x)
        in_specs=[
            pl.BlockSpec((H, W * Cin), lambda b: (b, 0)),            # per-image input rows
            pl.BlockSpec((3 * W * Cin, W * C1), lambda b: (0, 0)),   # weights stay resident
            pl.BlockSpec((1, W * C1), lambda b: (0, 0)),
            pl.BlockSpec((3 * W1 * C1, W1 * C2), lambda b: (0, 0)),
            pl.BlockSpec((1, W1 * C2), lambda b: (0, 0)),
            pl.BlockSpec((H2 * W2 * C2, FC_OUT), lambda b: (0, 0)),
            pl.BlockSpec((1, FC_OUT), lambda b: (0, 0)),
        ],
        out_specs=pl.BlockSpec((1, 1, FC_OUT), lambda b: (b, 0, 0)),
        scratch_shapes=[
            pltpu.VMEM((H + 2, 3 * W * Cin), jnp.float32),     # conv1 merged-tap LHS
            pltpu.VMEM((H, W * C1), jnp.float32),              # conv1 + relu
            pltpu.VMEM((H1 + 2, 3 * W1 * C1), jnp.float32),    # conv2 merged-tap LHS
            pltpu.VMEM((H1, W1 * C2), jnp.float32),            # conv2 + relu
            pltpu.VMEM((1, H2 * W2 * C2), jnp.float32),        # pool2, lane-dense (h2,w2,c2)
        ],
    )

    out = pl.pallas_call(
        kernel,
        out_shape=jax.ShapeDtypeStruct((B, 1, FC_OUT), jnp.float32),
        grid_spec=grid_spec,
        compiler_params=pltpu.CompilerParams(dimension_semantics=("parallel",)),
        cost_estimate=pl.CostEstimate(flops=flops, transcendentals=0,
                                      bytes_accessed=bytes_accessed),
    )(x2d, t1, b1row, t2, b2row, mfc, bfcrow)
    return out.reshape(B, FC_OUT)


# ---------------------------------------------------------------------------
# Pure-JAX reference (same semantics as the PyTorch forward)
# ---------------------------------------------------------------------------

def reference_forward(x_nchw, params):
    dn = ("NHWC", "HWIO", "NHWC")
    x = jnp.transpose(x_nchw, (0, 2, 3, 1))
    x = lax.conv_general_dilated(x, params["w1"], (1, 1), "SAME", dimension_numbers=dn)
    x = jnp.maximum(x + params["b1"][None, None, None, :], 0.0)
    x = lax.reduce_window(x, -jnp.inf, lax.max, (1, 2, 2, 1), (1, 2, 2, 1), "VALID")
    x = lax.conv_general_dilated(x, params["w2"], (1, 1), "SAME", dimension_numbers=dn)
    x = jnp.maximum(x + params["b2"][None, None, None, :], 0.0)
    x = lax.reduce_window(x, -jnp.inf, lax.max, (1, 2, 2, 1), (1, 2, 2, 1), "VALID")
    x = lax.reduce_window(x, 0.0, lax.add, (1, 2, 2, 1), (1, 2, 2, 1), "VALID") * 0.25
    x = jnp.transpose(x, (0, 3, 1, 2)).reshape(x.shape[0], -1)
    return x @ params["wfc"] + params["bfc"]


# ---------------------------------------------------------------------------
# Main
# ---------------------------------------------------------------------------

if __name__ == "__main__":
    key = jax.random.PRNGKey(0)
    ks = jax.random.split(key, 8)

    B, Cin, H, W = 2, 4, 16, 16
    C1, C2, FC_IN, FC_OUT = 8, 16, 16 * 2 * 2, 32

    params = {
        "w1": 0.1 * jax.random.normal(ks[0], (3, 3, Cin, C1), jnp.float32),
        "b1": 0.1 * jax.random.normal(ks[1], (C1,), jnp.float32),
        "w2": 0.1 * jax.random.normal(ks[2], (3, 3, C1, C2), jnp.float32),
        "b2": 0.1 * jax.random.normal(ks[3], (C2,), jnp.float32),
        "wfc": 0.1 * jax.random.normal(ks[4], (FC_IN, FC_OUT), jnp.float32),
        "bfc": 0.1 * jax.random.normal(ks[5], (FC_OUT,), jnp.float32),
    }
    x = jax.random.normal(ks[6], (B, Cin, H, W), jnp.float32)

    out = jax.block_until_ready(feature_extractor_forward(x, params))
    ref = jax.block_until_ready(reference_forward(x, params))

    assert out.shape == (B, FC_OUT), out.shape
    max_err = float(jnp.max(jnp.abs(out - ref)))
    assert jnp.allclose(out, ref, rtol=2e-2, atol=2e-2), f"mismatch: max abs err {max_err}"

    print("KERNEL_OK")
</pallas_src>

<mosaic_0001>
module attributes {stable_mosaic.version = 11 : i64} {
  func.func @_fused_forward_kernel(%arg0: i32, %arg1: memref<16x64xbf16, #tpu.memory_space<vmem>>, %arg2: memref<192x128xbf16, #tpu.memory_space<vmem>>, %arg3: memref<1x128xf32, #tpu.memory_space<vmem>>, %arg4: memref<192x128xbf16, #tpu.memory_space<vmem>>, %arg5: memref<1x128xf32, #tpu.memory_space<vmem>>, %arg6: memref<256x32xbf16, #tpu.memory_space<vmem>>, %arg7: memref<1x32xf32, #tpu.memory_space<vmem>>, %arg8: memref<1x1x32xf32, #tpu.memory_space<vmem>>, %arg9: memref<18x192xf32, #tpu.memory_space<vmem>>, %arg10: memref<16x128xf32, #tpu.memory_space<vmem>>, %arg11: memref<10x192xf32, #tpu.memory_space<vmem>>, %arg12: memref<8x128xf32, #tpu.memory_space<vmem>>, %arg13: memref<1x256xf32, #tpu.memory_space<vmem>>) attributes {dimension_semantics = [#tpu.dimension_semantics<parallel>], iteration_bounds = array<i64: 2>, scalar_prefetch = 0 : i64, scratch_operands = 5 : i64, tpu.core_type = #tpu.core_type<tc>, window_params = [{transform_indices = @transform_0, window_bounds = array<i64: 16, 64>}, {pipeline_mode = #tpu.pipeline_mode<synchronous>, transform_indices = @transform_1, window_bounds = array<i64: 192, 128>}, {pipeline_mode = #tpu.pipeline_mode<synchronous>, transform_indices = @transform_2, window_bounds = array<i64: 1, 128>}, {pipeline_mode = #tpu.pipeline_mode<synchronous>, transform_indices = @transform_3, window_bounds = array<i64: 192, 128>}, {pipeline_mode = #tpu.pipeline_mode<synchronous>, transform_indices = @transform_4, window_bounds = array<i64: 1, 128>}, {pipeline_mode = #tpu.pipeline_mode<synchronous>, transform_indices = @transform_5, window_bounds = array<i64: 256, 32>}, {pipeline_mode = #tpu.pipeline_mode<synchronous>, transform_indices = @transform_6, window_bounds = array<i64: 1, 32>}, {transform_indices = @transform_7, window_bounds = array<i64: 1, 1, 32>}]} {
    %c0 = arith.constant 0 : index
    %c0_0 = arith.constant 0 : index
    %0 = vector.load %arg1[%c0, %c0_0] : memref<16x64xbf16, #tpu.memory_space<vmem>>, vector<16x64xbf16>
    %1 = arith.extf %0 : vector<16x64xbf16> to vector<16x64xf32>
    %c2 = arith.constant 2 : index
    %c0_1 = arith.constant 0 : index
    %2 = vector.load %arg9[%c2, %c0_1] : memref<18x192xf32, #tpu.memory_space<vmem>>, vector<16x64xf32>
    tpu.vector_store %arg9[%c2, %c0_1], %1 {strides = array<i32>} : memref<18x192xf32, #tpu.memory_space<vmem>>, vector<16x64xf32>,
    %c1 = arith.constant 1 : index
    %c64 = arith.constant 64 : index
    %3 = vector.load %arg9[%c1, %c64] : memref<18x192xf32, #tpu.memory_space<vmem>>, vector<16x64xf32>
    tpu.vector_store %arg9[%c1, %c64], %1 {strides = array<i32>} : memref<18x192xf32, #tpu.memory_space<vmem>>, vector<16x64xf32>,
    %c0_2 = arith.constant 0 : index
    %c128 = arith.constant 128 : index
    %4 = vector.load %arg9[%c0_2, %c128] : memref<18x192xf32, #tpu.memory_space<vmem>>, vector<16x64xf32>
    tpu.vector_store %arg9[%c0_2, %c128], %1 {strides = array<i32>} : memref<18x192xf32, #tpu.memory_space<vmem>>, vector<16x64xf32>,
    %cst = arith.constant 0.000000e+00 : f32
    %5 = vector.broadcast %cst : f32 to vector<1x64xf32>
    %c1_3 = arith.constant 1 : index
    %c0_4 = arith.constant 0 : index
    %6 = vector.load %arg9[%c1_3, %c0_4] : memref<18x192xf32, #tpu.memory_space<vmem>>, vector<1x64xf32>
    tpu.vector_store %arg9[%c1_3, %c0_4], %5 {strides = array<i32>} : memref<18x192xf32, #tpu.memory_space<vmem>>, vector<1x64xf32>,
    %c16 = arith.constant 16 : index
    %c128_5 = arith.constant 128 : index
    %7 = vector.load %arg9[%c16, %c128_5] : memref<18x192xf32, #tpu.memory_space<vmem>>, vector<1x64xf32>
    tpu.vector_store %arg9[%c16, %c128_5], %5 {strides = array<i32>} : memref<18x192xf32, #tpu.memory_space<vmem>>, vector<1x64xf32>,
    %c1_6 = arith.constant 1 : index
    %c0_7 = arith.constant 0 : index
    %8 = vector.load %arg9[%c1_6, %c0_7] : memref<18x192xf32, #tpu.memory_space<vmem>>, vector<16x192xf32>
    %9 = arith.truncf %8 : vector<16x192xf32> to vector<16x192xbf16>
    %c0_8 = arith.constant 0 : index
    %c0_9 = arith.constant 0 : index
    %10 = vector.load %arg2[%c0_8, %c0_9] : memref<192x128xbf16, #tpu.memory_space<vmem>>, vector<192x128xbf16>
    %cst_10 = arith.constant dense<0.000000e+00> : vector<16x128xf32>
    %11 = tpu.matmul %9, %10, %cst_10 {dimension_numbers = #tpu.dot_dimension_numbers<[1], [0], [0], [1], [0, 0, 1, 1], [], []>} : vector<16x192xbf16>, vector<192x128xbf16>, vector<16x128xf32> -> vector<16x128xf32>
    %c0_11 = arith.constant 0 : index
    %c0_12 = arith.constant 0 : index
    %12 = vector.load %arg3[%c0_11, %c0_12] : memref<1x128xf32, #tpu.memory_space<vmem>>, vector<1x128xf32>
    %13 = vector.broadcast %12 : vector<1x128xf32> to vector<16x128xf32>
    %14 = arith.addf %11, %13 : vector<16x128xf32>
    %cst_13 = arith.constant 0.000000e+00 : f32
    %15 = vector.broadcast %cst_13 : f32 to vector<16x128xf32>
    %16 = arith.maximumf %14, %15 : vector<16x128xf32>
    %c0_14 = arith.constant 0 : index
    %c0_15 = arith.constant 0 : index
    %17 = vector.load %arg10[%c0_14, %c0_15] : memref<16x128xf32, #tpu.memory_space<vmem>>, vector<16x128xf32>
    tpu.vector_store %arg10[%c0_14, %c0_15], %16 {strides = array<i32>} : memref<16x128xf32, #tpu.memory_space<vmem>>, vector<16x128xf32>,
    %c0_16 = arith.constant 0 : index
    %c0_17 = arith.constant 0 : index
    %18 = tpu.strided_load %arg10[%c0_16, %c0_17] {strides = array<i32: 2, 1>} : memref<16x128xf32, #tpu.memory_space<vmem>>, vector<8x128xf32>
    %c1_18 = arith.constant 1 : index
    %c0_19 = arith.constant 0 : index
    %19 = tpu.strided_load %arg10[%c1_18, %c0_19] {strides = array<i32: 2, 1>} : memref<16x128xf32, #tpu.memory_space<vmem>>, vector<8x128xf32>
    %20 = arith.maximumf %18, %19 : vector<8x128xf32>
    %21 = vector.extract_strided_slice %20 {offsets = [0, 0], sizes = [8, 64], strides = [1, 1]} : vector<8x128xf32> to vector<8x64xf32>
    %22 = vector.extract_strided_slice %20 {offsets = [0, 64], sizes = [8, 64], strides = [1, 1]} : vector<8x128xf32> to vector<8x64xf32>
    %23 = arith.maximumf %21, %22 : vector<8x64xf32>
    %c2_20 = arith.constant 2 : index
    %c0_21 = arith.constant 0 : index
    %24 = vector.load %arg11[%c2_20, %c0_21] : memref<10x192xf32, #tpu.memory_space<vmem>>, vector<8x64xf32>
    tpu.vector_store %arg11[%c2_20, %c0_21], %23 {strides = array<i32>} : memref<10x192xf32, #tpu.memory_space<vmem>>, vector<8x64xf32>,
    %c1_22 = arith.constant 1 : index
    %c64_23 = arith.constant 64 : index
    %25 = vector.load %arg11[%c1_22, %c64_23] : memref<10x192xf32, #tpu.memory_space<vmem>>, vector<8x64xf32>
    tpu.vector_store %arg11[%c1_22, %c64_23], %23 {strides = array<i32>} : memref<10x192xf32, #tpu.memory_space<vmem>>, vector<8x64xf32>,
    %c0_24 = arith.constant 0 : index
    %c128_25 = arith.constant 128 : index
    %26 = vector.load %arg11[%c0_24, %c128_25] : memref<10x192xf32, #tpu.memory_space<vmem>>, vector<8x64xf32>
    tpu.vector_store %arg11[%c0_24, %c128_25], %23 {strides = array<i32>} : memref<10x192xf32, #tpu.memory_space<vmem>>, vector<8x64xf32>,
    %cst_26 = arith.constant 0.000000e+00 : f32
    %27 = vector.broadcast %cst_26 : f32 to vector<1x64xf32>
    %c1_27 = arith.constant 1 : index
    %c0_28 = arith.constant 0 : index
    %28 = vector.load %arg11[%c1_27, %c0_28] : memref<10x192xf32, #tpu.memory_space<vmem>>, vector<1x64xf32>
    tpu.vector_store %arg11[%c1_27, %c0_28], %27 {strides = array<i32>} : memref<10x192xf32, #tpu.memory_space<vmem>>, vector<1x64xf32>,
    %c8 = arith.constant 8 : index
    %c128_29 = arith.constant 128 : index
    %29 = vector.load %arg11[%c8, %c128_29] : memref<10x192xf32, #tpu.memory_space<vmem>>, vector<1x64xf32>
    tpu.vector_store %arg11[%c8, %c128_29], %27 {strides = array<i32>} : memref<10x192xf32, #tpu.memory_space<vmem>>, vector<1x64xf32>,
    %c1_30 = arith.constant 1 : index
    %c0_31 = arith.constant 0 : index
    %30 = vector.load %arg11[%c1_30, %c0_31] : memref<10x192xf32, #tpu.memory_space<vmem>>, vector<8x192xf32>
    %31 = arith.truncf %30 : vector<8x192xf32> to vector<8x192xbf16>
    %c0_32 = arith.constant 0 : index
    %c0_33 = arith.constant 0 : index
    %32 = vector.load %arg4[%c0_32, %c0_33] : memref<192x128xbf16, #tpu.memory_space<vmem>>, vector<192x128xbf16>
    %cst_34 = arith.constant dense<0.000000e+00> : vector<8x128xf32>
    %33 = tpu.matmul %31, %32, %cst_34 {dimension_numbers = #tpu.dot_dimension_numbers<[1], [0], [0], [1], [0, 0, 1, 1], [], []>} : vector<8x192xbf16>, vector<192x128xbf16>, vector<8x128xf32> -> vector<8x128xf32>
    %c0_35 = arith.constant 0 : index
    %c0_36 = arith.constant 0 : index
    %34 = vector.load %arg5[%c0_35, %c0_36] : memref<1x128xf32, #tpu.memory_space<vmem>>, vector<1x128xf32>
    %35 = vector.broadcast %34 : vector<1x128xf32> to vector<8x128xf32>
    %36 = arith.addf %33, %35 : vector<8x128xf32>
    %cst_37 = arith.constant 0.000000e+00 : f32
    %37 = vector.broadcast %cst_37 : f32 to vector<8x128xf32>
    %38 = arith.maximumf %36, %37 : vector<8x128xf32>
    %c0_38 = arith.constant 0 : index
    %c0_39 = arith.constant 0 : index
    %39 = vector.load %arg12[%c0_38, %c0_39] : memref<8x128xf32, #tpu.memory_space<vmem>>, vector<8x128xf32>
    tpu.vector_store %arg12[%c0_38, %c0_39], %38 {strides = array<i32>} : memref<8x128xf32, #tpu.memory_space<vmem>>, vector<8x128xf32>,
    %c0_40 = arith.constant 0 : index
    %c0_41 = arith.constant 0 : index
    %40 = tpu.strided_load %arg12[%c0_40, %c0_41] {strides = array<i32: 2, 1>} : memref<8x128xf32, #tpu.memory_space<vmem>>, vector<4x128xf32>
    %c1_42 = arith.constant 1 : index
    %c0_43 = arith.constant 0 : index
    %41 = tpu.strided_load %arg12[%c1_42, %c0_43] {strides = array<i32: 2, 1>} : memref<8x128xf32, #tpu.memory_space<vmem>>, vector<4x128xf32>
    %42 = arith.maximumf %40, %41 : vector<4x128xf32>
    %43 = vector.extract_strided_slice %42 {offsets = [0, 0], sizes = [4, 64], strides = [1, 1]} : vector<4x128xf32> to vector<4x64xf32>
    %44 = vector.extract_strided_slice %42 {offsets = [0, 64], sizes = [4, 64], strides = [1, 1]} : vector<4x128xf32> to vector<4x64xf32>
    %45 = arith.maximumf %43, %44 : vector<4x64xf32>
    %46 = vector.extract_strided_slice %45 {offsets = [0, 0], sizes = [1, 64], strides = [1, 1]} : vector<4x64xf32> to vector<1x64xf32>
    %c0_44 = arith.constant 0 : index
    %c0_45 = arith.constant 0 : index
    %47 = vector.load %arg13[%c0_44, %c0_45] : memref<1x256xf32, #tpu.memory_space<vmem>>, vector<1x64xf32>
    tpu.vector_store %arg13[%c0_44, %c0_45], %46 {strides = array<i32>} : memref<1x256xf32, #tpu.memory_space<vmem>>, vector<1x64xf32>,
    %48 = vector.extract_strided_slice %45 {offsets = [1, 0], sizes = [1, 64], strides = [1, 1]} : vector<4x64xf32> to vector<1x64xf32>
    %c0_46 = arith.constant 0 : index
    %c64_47 = arith.constant 64 : index
    %49 = vector.load %arg13[%c0_46, %c64_47] : memref<1x256xf32, #tpu.memory_space<vmem>>, vector<1x64xf32>
    tpu.vector_store %arg13[%c0_46, %c64_47], %48 {strides = array<i32>} : memref<1x256xf32, #tpu.memory_space<vmem>>, vector<1x64xf32>,
    %50 = vector.extract_strided_slice %45 {offsets = [2, 0], sizes = [1, 64], strides = [1, 1]} : vector<4x64xf32> to vector<1x64xf32>
    %c0_48 = arith.constant 0 : index
    %c128_49 = arith.constant 128 : index
    %51 = vector.load %arg13[%c0_48, %c128_49] : memref<1x256xf32, #tpu.memory_space<vmem>>, vector<1x64xf32>
    tpu.vector_store %arg13[%c0_48, %c128_49], %50 {strides = array<i32>} : memref<1x256xf32, #tpu.memory_space<vmem>>, vector<1x64xf32>,
    %52 = vector.extract_strided_slice %45 {offsets = [3, 0], sizes = [1, 64], strides = [1, 1]} : vector<4x64xf32> to vector<1x64xf32>
    %c0_50 = arith.constant 0 : index
    %c192 = arith.constant 192 : index
    %53 = vector.load %arg13[%c0_50, %c192] : memref<1x256xf32, #tpu.memory_space<vmem>>, vector<1x64xf32>
    tpu.vector_store %arg13[%c0_50, %c192], %52 {strides = array<i32>} : memref<1x256xf32, #tpu.memory_space<vmem>>, vector<1x64xf32>,
    %c0_51 = arith.constant 0 : index
    %c0_52 = arith.constant 0 : index
    %54 = vector.load %arg13[%c0_51, %c0_52] : memref<1x256xf32, #tpu.memory_space<vmem>>, vector<1x256xf32>
    %55 = arith.truncf %54 : vector<1x256xf32> to vector<1x256xbf16>
    %c0_53 = arith.constant 0 : index
    %c0_54 = arith.constant 0 : index
    %56 = vector.load %arg6[%c0_53, %c0_54] : memref<256x32xbf16, #tpu.memory_space<vmem>>, vector<256x32xbf16>
    %cst_55 = arith.constant dense<0.000000e+00> : vector<1x32xf32>
    %57 = tpu.matmul %55, %56, %cst_55 {dimension_numbers = #tpu.dot_dimension_numbers<[1], [0], [0], [1], [0, 0, 1, 1], [], []>} : vector<1x256xbf16>, vector<256x32xbf16>, vector<1x32xf32> -> vector<1x32xf32>
    %c0_56 = arith.constant 0 : index
    %c0_57 = arith.constant 0 : index
    %58 = vector.load %arg7[%c0_56, %c0_57] : memref<1x32xf32, #tpu.memory_space<vmem>>, vector<1x32xf32>
    %59 = arith.addf %57, %58 : vector<1x32xf32>
    %c0_58 = arith.constant 0 : index
    %c0_59 = arith.constant 0 : index
    %c0_60 = arith.constant 0 : index
    %60 = vector.load %arg8[%c0_58, %c0_59, %c0_60] : memref<1x1x32xf32, #tpu.memory_space<vmem>>, vector<1x1x32xf32>
    %61 = vector.shape_cast %60 : vector<1x1x32xf32> to vector<1x32xf32>
    %62 = vector.shape_cast %59 : vector<1x32xf32> to vector<1x1x32xf32>
    tpu.vector_store %arg8[%c0_58, %c0_59, %c0_60], %62 {strides = array<i32>} : memref<1x1x32xf32, #tpu.memory_space<vmem>>, vector<1x1x32xf32>,
    return
  }
  func.func @transform_0(%arg0: i32) -> (i32, i32) {
    %c0_i32 = arith.constant 0 : i32
    %c0_i32_0 = arith.constant 0 : i32
    return %arg0, %c0_i32 : i32, i32
  }
  func.func @transform_1(%arg0: i32) -> (i32, i32) {
    %c0_i32 = arith.constant 0 : i32
    %c0_i32_0 = arith.constant 0 : i32
    %c0_i32_1 = arith.constant 0 : i32
    return %c0_i32, %c0_i32_0 : i32, i32
  }
  func.func @transform_2(%arg0: i32) -> (i32, i32) {
    %c0_i32 = arith.constant 0 : i32
    %c0_i32_0 = arith.constant 0 : i32
    %c0_i32_1 = arith.constant 0 : i32
    return %c0_i32, %c0_i32_0 : i32, i32
  }
  func.func @transform_3(%arg0: i32) -> (i32, i32) {
    %c0_i32 = arith.constant 0 : i32
    %c0_i32_0 = arith.constant 0 : i32
    %c0_i32_1 = arith.constant 0 : i32
    return %c0_i32, %c0_i32_0 : i32, i32
  }
  func.func @transform_4(%arg0: i32) -> (i32, i32) {
    %c0_i32 = arith.constant 0 : i32
    %c0_i32_0 = arith.constant 0 : i32
    %c0_i32_1 = arith.constant 0 : i32
    return %c0_i32, %c0_i32_0 : i32, i32
  }
  func.func @transform_5(%arg0: i32) -> (i32, i32) {
    %c0_i32 = arith.constant 0 : i32
    %c0_i32_0 = arith.constant 0 : i32
    %c0_i32_1 = arith.constant 0 : i32
    return %c0_i32, %c0_i32_0 : i32, i32
  }
  func.func @transform_6(%arg0: i32) -> (i32, i32) {
    %c0_i32 = arith.constant 0 : i32
    %c0_i32_0 = arith.constant 0 : i32
    %c0_i32_1 = arith.constant 0 : i32
    return %c0_i32, %c0_i32_0 : i32, i32
  }
  func.func @transform_7(%arg0: i32) -> (i32, i32, i32) {
    %c0_i32 = arith.constant 0 : i32
    %c0_i32_0 = arith.constant 0 : i32
    %c0_i32_1 = arith.constant 0 : i32
    return %arg0, %c0_i32, %c0_i32_0 : i32, i32, i32
  }
}

</mosaic_0001>

<llo_original>
// kernel: tpu_custom_call.1
$region0: #{tpu_custom_call.1}
  #allocation0 [shape = 'u32[]', space=smem, size = 0x4, offset = 0x4, fixed_abs, tag = 'smem constant byte address 0x4 - core index']
  #allocation1 [shape = 'u32[144,128]{1,0:T(1,128)}', space=vmem, size = 0x12000, scoped, tag = 'internal scratch']
  #allocation2 [shape = 'f32[18,192]{1,0:T(8,128)}', space=vmem, size = 0x6000, scoped, tag = 'scratch operand']
  #allocation3 [shape = 'f32[16,128]{1,0:T(8,128)}', space=vmem, size = 0x2000, scoped, tag = 'scratch operand']
  #allocation4 [shape = 'f32[10,192]{1,0:T(8,128)}', space=vmem, size = 0x4000, scoped, tag = 'scratch operand']
  #allocation5 [shape = 'f32[8,128]{1,0:T(8,128)}', space=vmem, size = 0x1000, scoped, tag = 'scratch operand']
  #allocation6 [shape = 'f32[1,256]{1,0:T(1,128)}', space=vmem, size = 0x400, scoped, tag = 'scratch operand']
  %s0 = inlined_call_operand.vmem [shape: bf16[32,64], index: 0, kind: input, shape index: {}]
  %s1 = inlined_call_operand.vmem [shape: bf16[192,128], index: 1, kind: input, shape index: {}]
  %s2 = inlined_call_operand.vmem [shape: f32[1,128], index: 2, kind: input, shape index: {}]
  %s3 = inlined_call_operand.hbm [shape: bf16[192,128], index: 3, kind: input, shape index: {}]
  %s4 = inlined_call_operand.vmem [shape: f32[1,128], index: 4, kind: input, shape index: {}]
  %s5 = inlined_call_operand.vmem [shape: bf16[256,32], index: 5, kind: input, shape index: {}]
  %s6 = inlined_call_operand.vmem [shape: f32[1,32], index: 6, kind: input, shape index: {}]
  %s7 = inlined_call_operand.hbm [shape: f32[2,1,32], index: 7, kind: output, shape index: {}]
  %s8 = sld [smem:[#allocation0]]
  $region65: #{tpu_custom_call.1} parent=0
    _
  %s10 = ssub.s32 1, %s8
  %s11 = scalar_select 0, %s10, %s8
  $region1: #{tpu_custom_call.1} parent=0
    #allocation7 [shape = 'u8[49152]{0}', space=vmem, size = 0xc000, scoped, tag = 'input window, operand 3, single buffered']
    #allocation8 [shape = 's32[2]{0}', space=sflag, size = 0x8, scoped, tag = 'scoped memory for tpu_custom_call.1']
    #allocation9 [shape = 's32[2]{0}', space=sflag, size = 0x8, scoped, tag = 'scoped memory for tpu_custom_call.1']
    #allocation10 [shape = 'u8[1024]{0}', space=vmem, size = 0x400, scoped, tag = 'output window, operand 0']
    %12 = vsyncpa [#allocation8], 0
    %13 = vsyncpa [#allocation9], 0
    %s14 = scalar_lea.sflag [#allocation9], 1
    %15 = vsyncpa %s14, 0
    loop: start=0, step=1, limit=4
    $region2: #{tpu_custom_call.1} parent=1 // loop_pre_header
      _
    $region3: #{tpu_custom_call.1} parent=1 // loop_header
      %s17 = sphi 0, %s21
      %p18 = scmp.ge.s32.totalorder %s17, 4
      %s27 = sphi 0, %s29
      %s30 = sphi 0, %s27
      %s31 = sphi 0, %s30
      %s47 = sphi 0, %s31
      %s51 = sphi 0, %s51
      %s53 = sphi 0, %s51
      %s54 = sphi 0, %s53
      %s68 = sphi 0, %s54
      %s72 = sphi 0, %s72
      %s74 = sphi 0, %s72
      %s75 = sphi 0, %s74
      %s89 = sphi 0, %s75
      %s93 = sphi 0, %s93
      %s95 = sphi 0, %s93
      %s96 = sphi 0, %s95
      %s110 = sphi 0, %s96
      %s114 = sphi 0, %s114
      %s116 = sphi 0, %s114
      %s117 = sphi 0, %s116
      %s131 = sphi 0, %s117
      %s135 = sphi 0, %s135
      %s137 = sphi 0, %s135
      %s138 = sphi 0, %s137
      %s152 = sphi 0, %s138
      %s156 = sphi 0, %s156
      %s158 = sphi 0, %s156
      %s159 = sphi 0, %s158
      %s173 = sphi 0, %s159
      %s179 = sphi 0, %s181
      %s182 = sphi 0, %s179
      %s183 = sphi 0, %s182
      %s199 = sphi 0, %s183
    $region4: #{tpu_custom_call.1} parent=1 // loop_header_branch
      %20 = sbr.rel (%p18) target = $region8
    $region5: #{tpu_custom_call.1} parent=1 // loop_body
      %s22 = ssub.s32 %s17, 1
      %s23 = ssub.s32 %s17, 2
      %s24 = sadd.s32 %s17, 1
      %s25 = ssub.s32 %s17, %s24
      %p26 = scmp.eq.s32.totalorder %s25, 0
      %s28 = sadd.s32 %s27, 1
      %s29 = scalar_select %p26, %s27, %s28
      %p32 = pneg %p26
      %p33 = scmp.eq.s32.totalorder %s17, 1
      %p34 = por %p32, %p33
      %p35 = scmp.ne.s32.totalorder %s27, %s30
      %p36 = scmp.eq.s32.totalorder %s17, 0
      %p37 = por %p35, %p36
      %p38 = scmp.ne.s32.totalorder %s27, %s30
      %p39 = scmp.eq.s32.totalorder %s22, 1
      %p40 = por %p38, %p39
      %p41 = scmp.ne.s32.totalorder %s30, %s31
      %p42 = scmp.eq.s32.totalorder %s22, 0
      %p43 = por %p41, %p42
      %p44 = scmp.ne.s32.totalorder %s30, %s31
      %p45 = scmp.eq.s32.totalorder %s23, 1
      %p46 = por %p44, %p45
      %p48 = scmp.ne.s32.totalorder %s31, %s47
      %p49 = scmp.eq.s32.totalorder %s23, 0
      %p50 = por %p48, %p49
      %s52 = sadd.s32 %s51, 1
      %p55 = scmp.eq.s32.totalorder %s17, 1
      %p56 = scmp.ne.s32.totalorder %s51, %s53
      %p57 = scmp.eq.s32.totalorder %s17, 0
      %p58 = por %p56, %p57
      %p59 = scmp.ne.s32.totalorder %s51, %s53
      %p60 = scmp.eq.s32.totalorder %s22, 1
      %p61 = por %p59, %p60
      %p62 = scmp.ne.s32.totalorder %s53, %s54
      %p63 = scmp.eq.s32.totalorder %s22, 0
      %p64 = por %p62, %p63
      %p65 = scmp.ne.s32.totalorder %s53, %s54
      %p66 = scmp.eq.s32.totalorder %s23, 1
      %p67 = por %p65, %p66
      %p69 = scmp.ne.s32.totalorder %s54, %s68
      %p70 = scmp.eq.s32.totalorder %s23, 0
      %p71 = por %p69, %p70
      %s73 = sadd.s32 %s72, 1
      %p76 = scmp.eq.s32.totalorder %s17, 1
      %p77 = scmp.ne.s32.totalorder %s72, %s74
      %p78 = scmp.eq.s32.totalorder %s17, 0
      %p79 = por %p77, %p78
      %p80 = scmp.ne.s32.totalorder %s72, %s74
      %p81 = scmp.eq.s32.totalorder %s22, 1
      %p82 = por %p80, %p81
      %p83 = scmp.ne.s32.totalorder %s74, %s75
      %p84 = scmp.eq.s32.totalorder %s22, 0
      %p85 = por %p83, %p84
      %p86 = scmp.ne.s32.totalorder %s74, %s75
      %p87 = scmp.eq.s32.totalorder %s23, 1
      %p88 = por %p86, %p87
      %p90 = scmp.ne.s32.totalorder %s75, %s89
      %p91 = scmp.eq.s32.totalorder %s23, 0
      %p92 = por %p90, %p91
      %s94 = sadd.s32 %s93, 1
      %p97 = scmp.eq.s32.totalorder %s17, 1
      %p98 = scmp.ne.s32.totalorder %s93, %s95
      %p99 = scmp.eq.s32.totalorder %s17, 0
      %p100 = por %p98, %p99
      %p101 = scmp.ne.s32.totalorder %s93, %s95
      %p102 = scmp.eq.s32.totalorder %s22, 1
      %p103 = por %p101, %p102
      %p104 = scmp.ne.s32.totalorder %s95, %s96
      %p105 = scmp.eq.s32.totalorder %s22, 0
      %p106 = por %p104, %p105
      %p107 = scmp.ne.s32.totalorder %s95, %s96
      %p108 = scmp.eq.s32.totalorder %s23, 1
      %p109 = por %p107, %p108
      %p111 = scmp.ne.s32.totalorder %s96, %s110
      %p112 = scmp.eq.s32.totalorder %s23, 0
      %p113 = por %p111, %p112
      %s115 = sadd.s32 %s114, 1
      %p118 = scmp.eq.s32.totalorder %s17, 1
      %p119 = scmp.ne.s32.totalorder %s114, %s116
      %p120 = scmp.eq.s32.totalorder %s17, 0
      %p121 = por %p119, %p120
      %p122 = scmp.ne.s32.totalorder %s114, %s116
      %p123 = scmp.eq.s32.totalorder %s22, 1
      %p124 = por %p122, %p123
      %p125 = scmp.ne.s32.totalorder %s116, %s117
      %p126 = scmp.eq.s32.totalorder %s22, 0
      %p127 = por %p125, %p126
      %p128 = scmp.ne.s32.totalorder %s116, %s117
      %p129 = scmp.eq.s32.totalorder %s23, 1
      %p130 = por %p128, %p129
      %p132 = scmp.ne.s32.totalorder %s117, %s131
      %p133 = scmp.eq.s32.totalorder %s23, 0
      %p134 = por %p132, %p133
      %s136 = sadd.s32 %s135, 1
      %p139 = scmp.eq.s32.totalorder %s17, 1
      %p140 = scmp.ne.s32.totalorder %s135, %s137
      %p141 = scmp.eq.s32.totalorder %s17, 0
      %p142 = por %p140, %p141
      %p143 = scmp.ne.s32.totalorder %s135, %s137
      %p144 = scmp.eq.s32.totalorder %s22, 1
      %p145 = por %p143, %p144
      %p146 = scmp.ne.s32.totalorder %s137, %s138
      %p147 = scmp.eq.s32.totalorder %s22, 0
      %p148 = por %p146, %p147
      %p149 = scmp.ne.s32.totalorder %s137, %s138
      %p150 = scmp.eq.s32.totalorder %s23, 1
      %p151 = por %p149, %p150
      %p153 = scmp.ne.s32.totalorder %s138, %s152
      %p154 = scmp.eq.s32.totalorder %s23, 0
      %p155 = por %p153, %p154
      %s157 = sadd.s32 %s156, 1
      %p160 = scmp.eq.s32.totalorder %s17, 1
      %p161 = scmp.ne.s32.totalorder %s156, %s158
      %p162 = scmp.eq.s32.totalorder %s17, 0
      %p163 = por %p161, %p162
      %p164 = scmp.ne.s32.totalorder %s156, %s158
      %p165 = scmp.eq.s32.totalorder %s22, 1
      %p166 = por %p164, %p165
      %p167 = scmp.ne.s32.totalorder %s158, %s159
      %p168 = scmp.eq.s32.totalorder %s22, 0
      %p169 = por %p167, %p168
      %p170 = scmp.ne.s32.totalorder %s158, %s159
      %p171 = scmp.eq.s32.totalorder %s23, 1
      %p172 = por %p170, %p171
      %p174 = scmp.ne.s32.totalorder %s159, %s173
      %p175 = scmp.eq.s32.totalorder %s23, 0
      %p176 = por %p174, %p175
      %s177 = ssub.s32 %s17, %s24
      %p178 = scmp.eq.s32.totalorder %s177, 0
      %s180 = sadd.s32 %s179, 1
      %s181 = scalar_select %p178, %s179, %s180
      %p184 = pneg %p178
      %p185 = scmp.eq.s32.totalorder %s17, 1
      %p186 = por %p184, %p185
      %p187 = scmp.ne.s32.totalorder %s179, %s182
      %p188 = scmp.eq.s32.totalorder %s17, 0
      %p189 = por %p187, %p188
      %p190 = scmp.ne.s32.totalorder %s179, %s182
      %p191 = scmp.eq.s32.totalorder %s22, 1
      %p192 = por %p190, %p191
      %p193 = scmp.ne.s32.totalorder %s182, %s183
      %p194 = scmp.eq.s32.totalorder %s22, 0
      %p195 = por %p193, %p194
      %p196 = scmp.ne.s32.totalorder %s182, %s183
      %p197 = scmp.eq.s32.totalorder %s23, 1
      %p198 = por %p196, %p197
      %p200 = scmp.ne.s32.totalorder %s183, %s199
      %p201 = scmp.eq.s32.totalorder %s23, 0
      %p202 = por %p200, %p201
      %p203 = scmp.le.s32.totalorder 1, %s17
      %p204 = scmp.lt.s32.totalorder %s17, 3
      %p205 = pnand %p203, %p204
      %p206 = pneg %p205
      // Predicated region
      $region9: #{tpu_custom_call.1} parent=5 // pred_check
        _
      $region10: #{tpu_custom_call.1} parent=5 // pred_check_branch
        %208 = sbr.rel (%p205) target = $region12
      $region11: #{tpu_custom_call.1} parent=5 // pred_region
        %s209 = ssub.s32 %s17, 1
        // Predicated region
        $region13: #{tpu_custom_call.1} parent=11 // pred_check
          %p210 = pneg %p64
        $region14: #{tpu_custom_call.1} parent=11 // pred_check_branch
          %212 = sbr.rel (%p210) target = $region16
        $region15: #{tpu_custom_call.1} parent=11 // pred_region
          _
        $region16: #{tpu_custom_call.1} parent=11 // pred_fallthru
          _
        // Predicated region
        $region17: #{tpu_custom_call.1} parent=11 // pred_check
          %p213 = pneg %p85
        $region18: #{tpu_custom_call.1} parent=11 // pred_check_branch
          %215 = sbr.rel (%p213) target = $region20
        $region19: #{tpu_custom_call.1} parent=11 // pred_region
          _
        $region20: #{tpu_custom_call.1} parent=11 // pred_fallthru
          _
        // Predicated region
        $region21: #{tpu_custom_call.1} parent=11 // pred_check
          %p216 = pneg %p106
        $region22: #{tpu_custom_call.1} parent=11 // pred_check_branch
          %218 = sbr.rel (%p216) target = $region24
        $region23: #{tpu_custom_call.1} parent=11 // pred_region
          %s220 = ssub.s32 1536, 1536
          %221 = vsyncadd [#allocation8], %s220
          %s222 = sshll.u32 [#allocation7], 4
          %s223 = int_to_ptr.vmem [resolvable:$true] %s222
          %228 = dma.hbm_to_vmem [thread:$0]  %s3, 1536, %s223, [#allocation8], 64, 64, 4
        $region24: #{tpu_custom_call.1} parent=11 // pred_fallthru
          _
        // Predicated region
        $region25: #{tpu_custom_call.1} parent=11 // pred_check
          %p229 = pneg %p127
        $region26: #{tpu_custom_call.1} parent=11 // pred_check_branch
          %231 = sbr.rel (%p229) target = $region28
        $region27: #{tpu_custom_call.1} parent=11 // pred_region
          _
        $region28: #{tpu_custom_call.1} parent=11 // pred_fallthru
          _
        // Predicated region
        $region29: #{tpu_custom_call.1} parent=11 // pred_check
          %p232 = pneg %p148
        $region30: #{tpu_custom_call.1} parent=11 // pred_check_branch
          %234 = sbr.rel (%p232) target = $region32
        $region31: #{tpu_custom_call.1} parent=11 // pred_region
          _
        $region32: #{tpu_custom_call.1} parent=11 // pred_fallthru
          _
        // Predicated region
        $region33: #{tpu_custom_call.1} parent=11 // pred_check
          %p235 = pneg %p169
        $region34: #{tpu_custom_call.1} parent=11 // pred_check_branch
          %237 = sbr.rel (%p235) target = $region36
        $region35: #{tpu_custom_call.1} parent=11 // pred_region
          _
        $region36: #{tpu_custom_call.1} parent=11 // pred_fallthru
          _
      $region12: #{tpu_custom_call.1} parent=5 // pred_fallthru
        _
      %p238 = scmp.lt.s32.totalorder %s17, 2
      // Predicated region
      $region37: #{tpu_custom_call.1} parent=5 // pred_check
        %p239 = pneg %p238
      $region38: #{tpu_custom_call.1} parent=5 // pred_check_branch
        %241 = sbr.rel (%p239) target = $region40
      $region39: #{tpu_custom_call.1} parent=5 // pred_region
        // Predicated region
        $region41: #{tpu_custom_call.1} parent=39 // pred_check
          %p242 = pneg %p37
        $region42: #{tpu_custom_call.1} parent=39 // pred_check_branch
          %244 = sbr.rel (%p242) target = $region44
        $region43: #{tpu_custom_call.1} parent=39 // pred_region
          %s245 = smul.u32 2, %s17
          %p246 = scmp.lt.s32.totalorder %s245, 3
          %s247 = scalar_select %p246, %s245, 3
          %s248 = smul.addr %s247, 4
          %s249 = scalar_lea.vmem %s0, %s248
          %s250 = smul.u32 2, %s17
        $region44: #{tpu_custom_call.1} parent=39 // pred_fallthru
          _
      $region40: #{tpu_custom_call.1} parent=5 // pred_fallthru
        _
      %p251 = scmp.le.s32.totalorder 1, %s17
      %p252 = scmp.lt.s32.totalorder %s17, 3
      %p253 = pnand %p251, %p252
      %p254 = pneg %p253
      // Predicated region
      $region45: #{tpu_custom_call.1} parent=5 // pred_check
        _
      $region46: #{tpu_custom_call.1} parent=5 // pred_check_branch
        %256 = sbr.rel (%p253) target = $region48
      $region47: #{tpu_custom_call.1} parent=5 // pred_region
        %s257 = ssub.s32 %s17, 1
        // Predicated region
        $region49: #{tpu_custom_call.1} parent=47 // pred_check
          %p258 = pneg %p106
        $region50: #{tpu_custom_call.1} parent=47 // pred_check_branch
          %260 = sbr.rel (%p258) target = $region52
        $region51: #{tpu_custom_call.1} parent=47 // pred_region
          %261 = dma.done [#allocation8], 1536
        $region52: #{tpu_custom_call.1} parent=47 // pred_fallthru
          _
        %s262 = smul.u32 2, %s22
        %p263 = scmp.lt.s32.totalorder %s262, 3
        %s264 = scalar_select %p263, %s262, 3
        %s265 = smul.addr %s264, 4
        %s266 = scalar_lea.vmem %s0, %s265
        %p267 = pneg %p43
        %p268 = pneg %p40
        %p269 = pneg %p64
        %p270 = pneg %p61
        %p271 = pneg %p85
        %p272 = pneg %p82
        %p273 = pneg %p106
        %p274 = pneg %p103
        %p275 = pneg %p127
        %p276 = pneg %p124
        %p277 = pneg %p148
        %p278 = pneg %p145
        %p279 = pneg %p169
        %p280 = pneg %p166
        %p281 = pneg %p195
        %p282 = pneg %p192
        %s283 = sand.u32 %s182, 1
        %s284 = scalar_lea.sflag [#allocation9], %s283
        %s285 = sand.u32 %s182, 1
        %s286 = scalar_lea.vmem [#allocation10], %s285
        %s287 = smul.u32 2, %s22
        %p288 = scmp.lt.s32.totalorder %s287, 3
        %s289 = scalar_select %p288, %s287, 3
        %s290 = smul.addr %s289, 4
        %s291 = scalar_lea.vmem %s0, %s290
        %s292 = smul.u32 2, %s22
        %v294 = vld [vmem:[%s291] sm:$0xf]
        %v295 = vld [vmem:[%s291 + $0x4] sm:$0xf]
        %v296 = vunpack.c.l.bf16 %v294
        %v297 = vunpack.c.l.bf16 %v295
        %vm300 = vcmask 1041408
        %v301 = vrot.slane %v296, 6
        %v302 = vrot.slane %v297, 6
        %v303 = vsel %vm300, %v301, %v302
        %vm307 = vcmask 523266
        %308 = vst.msk [vmem:[#allocation2] sm:$0xfc] %vm307, %v301
        %vm309 = vcmask 523264
        %310 = vst.msk [vmem:[#allocation2 + $0x10] sm:$0xff] %vm309, %v303
        %vm311 = vcmask 517120
        %312 = vst.msk [vmem:[#allocation2 + $0x20] sm:$0x3] %vm311, %v302
        %vm313 = vcmask 1040384
        %v314 = vrot.slane %v296, 7
        %v315 = vrot.slane %v297, 7
        %v316 = vsel %vm313, %v314, %v315
        %317 = vrot.lane.b32.xlu0 %v314, 64
        %v318 = vpop.permute.xlu0 %317
        %319 = vrot.lane.b32.xlu0 %v316, 64
        %v320 = vpop.permute.xlu0 %319
        %321 = vrot.lane.b32.xlu0 %v315, 64
        %v322 = vpop.permute.xlu0 %321
        %vm326 = vcmask 1048065
        %327 = vst.msk [vmem:[#allocation2] sm:$0xfe] %vm326, %v318
        %vm328 = vcmask 1048064
        %329 = vst.msk [vmem:[#allocation2 + $0x10] sm:$0xff] %vm328, %v320
        %vm330 = vcmask 1040896
        %331 = vst.msk [vmem:[#allocation2 + $0x20] sm:$0x1] %vm330, %v322
        %332 = vst.msk [vmem:[#allocation2 + $0x8] sm:$0xff] %vm309, %v296
        %333 = vst.msk [vmem:[#allocation2 + $0x18] sm:$0xff] %vm309, %v297
        %vm334 = vcmask 516096
        %335 = vst.msk [vmem:[#allocation2 + $0x1] sm:$0x1] %vm334, 0.0
        %336 = vst.msk [vmem:[#allocation2 + $0x28] sm:$0x1] %vm334, 0.0
        %v337 = vld [vmem:[#allocation2] sm:$0xfe]
        %v338 = vld [vmem:[#allocation2 + $0x8] sm:$0xfe]
        %v339 = vld [vmem:[#allocation2 + $0x10] sm:$0xff]
        %v340 = vld [vmem:[#allocation2 + $0x18] sm:$0xff]
        %v341 = vld [vmem:[#allocation2 + $0x20] sm:$0x1]
        %v342 = vld [vmem:[#allocation2 + $0x28] sm:$0x1]
        %v343 = vpack.c.bf16 %v339, %v337
        %v344 = vpack.c.bf16 %v340, %v338
        %v345 = vpack.c.bf16 %v341, %v341
        %v346 = vpack.c.bf16 %v342, %v342
        %v347 = vld [vmem:[%s1] sm:$0xf]
        %v348 = vld [vmem:[%s1 + $0x4] sm:$0xf]
        %v349 = vld [vmem:[%s1 + $0x8] sm:$0xf]
        %v350 = vld [vmem:[%s1 + $0xc] sm:$0xf]
        %v351 = vld [vmem:[%s1 + $0x10] sm:$0xf]
        %v352 = vld [vmem:[%s1 + $0x14] sm:$0xf]
        %v353 = vld [vmem:[%s1 + $0x18] sm:$0xf]
        %v354 = vld [vmem:[%s1 + $0x1c] sm:$0xf]
        %v355 = vld [vmem:[%s1 + $0x20] sm:$0xf]
        %v356 = vld [vmem:[%s1 + $0x24] sm:$0xf]
        %v357 = vld [vmem:[%s1 + $0x28] sm:$0xf]
        %v358 = vld [vmem:[%s1 + $0x2c] sm:$0xf]
        %v359 = vld [vmem:[%s1 + $0x30] sm:$0xf]
        %v360 = vld [vmem:[%s1 + $0x34] sm:$0xf]
        %v361 = vld [vmem:[%s1 + $0x38] sm:$0xf]
        %v362 = vld [vmem:[%s1 + $0x3c] sm:$0xf]
        %v363 = vld [vmem:[%s1 + $0x40] sm:$0xf]
        %v364 = vld [vmem:[%s1 + $0x44] sm:$0xf]
        %v365 = vld [vmem:[%s1 + $0x48] sm:$0xf]
        %v366 = vld [vmem:[%s1 + $0x4c] sm:$0xf]
        %v367 = vld [vmem:[%s1 + $0x50] sm:$0xf]
        %v368 = vld [vmem:[%s1 + $0x54] sm:$0xf]
        %v369 = vld [vmem:[%s1 + $0x58] sm:$0xf]
        %v370 = vld [vmem:[%s1 + $0x5c] sm:$0xf]
        %v371 = vld [vmem:[%s2] sm:$0x1]
        %v373 = vlaneseq
        %v374 = vshrl.u32 %v373, 7
        %v375 = vsub.s32 0, %v374
        %v376 = vrot.slane %v371, %v375
        %vm378 = vsmask.f32 7424
        %v380 = vshrl.u32 %v343, 16
        %v382 = vshll.u32 %v343, 16
        %v384 = vrot.slane %v382, 1
        %v385 = vor.u32 %v380, %v384
        %v387 = vshll.u32 %v345, 16
        %v389 = vrot.slane %v387, 1
        %v390 = vsel %vm378, %v385, %v389
        %v392 = vshrl.u32 %v344, 16
        %v394 = vshll.u32 %v344, 16
        %v396 = vrot.slane %v394, 1
        %v397 = vor.u32 %v392, %v396
        %v399 = vshll.u32 %v346, 16
        %v401 = vrot.slane %v399, 1
        %v402 = vsel %vm378, %v397, %v401
        %v428 = vunpack.c.l.b16 %v347
        %v429 = vunpack.c.l.b16 %v348
        %v430 = vunpack.c.l.b16 %v349
        %v431 = vunpack.c.l.b16 %v350
        %v432 = vunpack.c.l.b16 %v351
        %v433 = vunpack.c.l.b16 %v352
        %v434 = vunpack.c.l.b16 %v353
        %v435 = vunpack.c.l.b16 %v354
        %v436 = vunpack.c.l.b16 %v355
        %v437 = vunpack.c.l.b16 %v356
        %v438 = vunpack.c.l.b16 %v357
        %v439 = vunpack.c.l.b16 %v358
        %v440 = vunpack.c.l.b16 %v359
        %v441 = vunpack.c.l.b16 %v360
        %v442 = vunpack.c.l.b16 %v361
        %v443 = vunpack.c.l.b16 %v362
        %v444 = vunpack.c.l.b16 %v363
        %v445 = vunpack.c.l.b16 %v364
        %v446 = vunpack.c.l.b16 %v365
        %v447 = vunpack.c.l.b16 %v366
        %v448 = vunpack.c.l.b16 %v367
        %v449 = vunpack.c.l.b16 %v368
        %v450 = vunpack.c.l.b16 %v369
        %v451 = vunpack.c.l.b16 %v370
        %v452 = vpack.c.b16 %v429, %v428
        %v453 = vpack.c.b16 %v431, %v430
        %v454 = vpack.c.b16 %v433, %v432
        %v455 = vpack.c.b16 %v435, %v434
        %v456 = vpack.c.b16 %v437, %v436
        %v457 = vpack.c.b16 %v439, %v438
        %v458 = vpack.c.b16 %v441, %v440
        %v459 = vpack.c.b16 %v443, %v442
        %v460 = vpack.c.b16 %v445, %v444
        %v461 = vpack.c.b16 %v447, %v446
        %v462 = vpack.c.b16 %v449, %v448
        %v463 = vpack.c.b16 %v451, %v450
        %v477 = vsel %vm309, %v402, 0
        %479 = vmatprep.subr.bf16.mxu0 0
        %480 = vmatpush1.bf16.msra.mxu0 %v452
        %481 = vmatprep.subr.bf16.mxu0 0
        %482 = vmatpush1.bf16.msra.mxu0 %v453
        %483 = vmatprep.subr.bf16.mxu0 0
        %484 = vmatpush1.bf16.msra.mxu0 %v454
        %485 = vmatprep.subr.bf16.mxu0 0
        %486 = vmatpush1.bf16.msra.mxu0 %v455
        %487 = vmatprep.subr.bf16.mxu0 0
        %488 = vmatpush1.bf16.msra.mxu0 %v456
        %489 = vmatprep.subr.bf16.mxu0 0
        %490 = vmatpush1.bf16.msra.mxu0 %v457
        %491 = vmatprep.subr.bf16.mxu0 0
        %492 = vmatpush1.bf16.msra.mxu0 %v458
        %493 = vmatprep.subr.bf16.mxu0 0
        %494 = vmatpush1.bf16.msra.mxu0 %v459
        %495 = vmatprep.subr.bf16.mxu0 0
        %496 = vmatpush1.bf16.msra.mxu0 %v460
        %497 = vmatprep.subr.bf16.mxu0 0
        %498 = vmatpush1.bf16.msra.mxu0 %v461
        %499 = vmatprep.subr.bf16.mxu0 0
        %500 = vmatpush1.bf16.msra.mxu0 %v462
        %501 = vmatprep.subr.bf16.mxu0 0
        %502 = vmatpush1.bf16.msra.mxu0 %v463
        %503 = vmatprep.subr.bf16.mxu0 0
        %504 = vmatpush1.bf16.msra.mxu0 0
        %505 = vmatprep.subr.bf16.mxu0 0
        %506 = vmatpush1.bf16.msra.mxu0 0
        %507 = vmatprep.subr.bf16.mxu0 0
        %508 = vmatpush1.bf16.msra.mxu0 0
        %509 = vmatprep.subr.bf16.mxu0 0
        %510 = vmatpush1.bf16.msra.mxu0 0
        %511 = vmatprep.mubr.bf16.mxu0 %v477
        %512 = vmatmul.mubr.bf16.gmra.mrb[0].mxu0 %v390
        %v513 = vpop.f32.mrb[0].mxu0
        %v514 = vadd.f32 %v376, %v513
        %v515 = vpop.f32.mrb[0].mxu0
        %v516 = vpop.f32.mrb[0].mxu0
        %v517 = vadd.f32 %v376, %v516
        %v518 = vpop.f32.mrb[0].mxu0
        %519 = vdwg.mxu0
        %v520 = vmax.f32 %v514, 0.0
        %v521 = vmax.f32 %v517, 0.0
        %522 = vst [vmem:[#allocation3] sm:$0xff] %v520
        %523 = vst [vmem:[#allocation3 + $0x8] sm:$0xff] %v521
        %v524 = vld [vmem:[#allocation3] ss:$2 sm:$0xff]
        %s525 = scalar_lea.vmem [#allocation3], 1
        %v526 = vld [vmem:[%s525] ss:$2 sm:$0xff]
        %v527 = vmax.f32 %v524, %v526
        %529 = vrot.lane.b32.xlu0 %v527, 64
        %v530 = vpop.permute.xlu0 %529
        %v532 = vmax.f32 %v527, %v530
        %v534 = vrot.slane %v532, 6
        %536 = vst.msk [vmem:[#allocation4] sm:$0xfc] %vm307, %v534
        %537 = vst.msk [vmem:[#allocation4 + $0x10] sm:$0x3] %vm311, %v534
        %v538 = vrot.slane %v532, 7
        %539 = vrot.lane.b32.xlu0 %v538, 64
        %v540 = vpop.permute.xlu0 %539
        %542 = vst.msk [vmem:[#allocation4] sm:$0xfe] %vm326, %v540
        %543 = vst.msk [vmem:[#allocation4 + $0x10] sm:$0x1] %vm330, %v540
        %544 = vst.msk [vmem:[#allocation4 + $0x8] sm:$0xff] %vm309, %v532
        %545 = vst.msk [vmem:[#allocation4 + $0x1] sm:$0x1] %vm334, 0.0
        %546 = vst.msk [vmem:[#allocation4 + $0x18] sm:$0x1] %vm334, 0.0
        %v547 = vld [vmem:[#allocation4] sm:$0xfe]
        %v548 = vld [vmem:[#allocation4 + $0x8] sm:$0xfe]
        %v549 = vld [vmem:[#allocation4 + $0x10] sm:$0x1]
        %v550 = vld [vmem:[#allocation4 + $0x18] sm:$0x1]
        %v551 = vpack.c.bf16 %v549, %v547
        %v552 = vpack.c.bf16 %v550, %v548
        %v553 = vld [vmem:[#allocation7] sm:$0xf]
        %v554 = vld [vmem:[#allocation7 + $0x4] sm:$0xf]
        %v555 = vld [vmem:[#allocation7 + $0x8] sm:$0xf]
        %v556 = vld [vmem:[#allocation7 + $0xc] sm:$0xf]
        %v557 = vld [vmem:[#allocation7 + $0x10] sm:$0xf]
        %v558 = vld [vmem:[#allocation7 + $0x14] sm:$0xf]
        %v559 = vld [vmem:[#allocation7 + $0x18] sm:$0xf]
        %v560 = vld [vmem:[#allocation7 + $0x1c] sm:$0xf]
        %v561 = vld [vmem:[#allocation7 + $0x20] sm:$0xf]
        %v562 = vld [vmem:[#allocation7 + $0x24] sm:$0xf]
        %v563 = vld [vmem:[#allocation7 + $0x28] sm:$0xf]
        %v564 = vld [vmem:[#allocation7 + $0x2c] sm:$0xf]
        %v565 = vld [vmem:[#allocation7 + $0x30] sm:$0xf]
        %v566 = vld [vmem:[#allocation7 + $0x34] sm:$0xf]
        %v567 = vld [vmem:[#allocation7 + $0x38] sm:$0xf]
        %v568 = vld [vmem:[#allocation7 + $0x3c] sm:$0xf]
        %v569 = vld [vmem:[#allocation7 + $0x40] sm:$0xf]
        %v570 = vld [vmem:[#allocation7 + $0x44] sm:$0xf]
        %v571 = vld [vmem:[#allocation7 + $0x48] sm:$0xf]
        %v572 = vld [vmem:[#allocation7 + $0x4c] sm:$0xf]
        %v573 = vld [vmem:[#allocation7 + $0x50] sm:$0xf]
        %v574 = vld [vmem:[#allocation7 + $0x54] sm:$0xf]
        %v575 = vld [vmem:[#allocation7 + $0x58] sm:$0xf]
        %v576 = vld [vmem:[#allocation7 + $0x5c] sm:$0xf]
        %v577 = vld [vmem:[%s4] sm:$0x1]
        %v579 = vlaneseq
        %v580 = vshrl.u32 %v579, 7
        %v581 = vsub.s32 0, %v580
        %v582 = vrot.slane %v577, %v581
        %v585 = vshrl.u32 %v551, 16
        %v587 = vshll.u32 %v551, 16
        %v589 = vrot.slane %v587, 1
        %v590 = vor.u32 %v585, %v589
        %v592 = vshrl.u32 %v552, 16
        %v594 = vshll.u32 %v552, 16
        %v596 = vrot.slane %v594, 1
        %v597 = vor.u32 %v592, %v596
        %v623 = vunpack.c.l.b16 %v553
        %v624 = vunpack.c.l.b16 %v554
        %v625 = vunpack.c.l.b16 %v555
        %v626 = vunpack.c.l.b16 %v556
        %v627 = vunpack.c.l.b16 %v557
        %v628 = vunpack.c.l.b16 %v558
        %v629 = vunpack.c.l.b16 %v559
        %v630 = vunpack.c.l.b16 %v560
        %v631 = vunpack.c.l.b16 %v561
        %v632 = vunpack.c.l.b16 %v562
        %v633 = vunpack.c.l.b16 %v563
        %v634 = vunpack.c.l.b16 %v564
        %v635 = vunpack.c.l.b16 %v565
        %v636 = vunpack.c.l.b16 %v566
        %v637 = vunpack.c.l.b16 %v567
        %v638 = vunpack.c.l.b16 %v568
        %v639 = vunpack.c.l.b16 %v569
        %v640 = vunpack.c.l.b16 %v570
        %v641 = vunpack.c.l.b16 %v571
        %v642 = vunpack.c.l.b16 %v572
        %v643 = vunpack.c.l.b16 %v573
        %v644 = vunpack.c.l.b16 %v574
        %v645 = vunpack.c.l.b16 %v575
        %v646 = vunpack.c.l.b16 %v576
        %v647 = vpack.c.b16 %v624, %v623
        %v648 = vpack.c.b16 %v626, %v625
        %v649 = vpack.c.b16 %v628, %v627
        %v650 = vpack.c.b16 %v630, %v629
        %v651 = vpack.c.b16 %v632, %v631
        %v652 = vpack.c.b16 %v634, %v633
        %v653 = vpack.c.b16 %v636, %v635
        %v654 = vpack.c.b16 %v638, %v637
        %v655 = vpack.c.b16 %v640, %v639
        %v656 = vpack.c.b16 %v642, %v641
        %v657 = vpack.c.b16 %v644, %v643
        %v658 = vpack.c.b16 %v646, %v645
        %v672 = vsel %vm309, %v597, 0
        %674 = vmatprep.subr.bf16.mxu0 0
        %675 = vmatpush1.bf16.msra.mxu0 %v647
        %676 = vmatprep.subr.bf16.mxu0 0
        %677 = vmatpush1.bf16.msra.mxu0 %v648
        %678 = vmatprep.subr.bf16.mxu0 0
        %679 = vmatpush1.bf16.msra.mxu0 %v649
        %680 = vmatprep.subr.bf16.mxu0 0
        %681 = vmatpush1.bf16.msra.mxu0 %v650
        %682 = vmatprep.subr.bf16.mxu0 0
        %683 = vmatpush1.bf16.msra.mxu0 %v651
        %684 = vmatprep.subr.bf16.mxu0 0
        %685 = vmatpush1.bf16.msra.mxu0 %v652
        %686 = vmatprep.subr.bf16.mxu0 0
        %687 = vmatpush1.bf16.msra.mxu0 %v653
        %688 = vmatprep.subr.bf16.mxu0 0
        %689 = vmatpush1.bf16.msra.mxu0 %v654
        %690 = vmatprep.subr.bf16.mxu0 0
        %691 = vmatpush1.bf16.msra.mxu0 %v655
        %692 = vmatprep.subr.bf16.mxu0 0
        %693 = vmatpush1.bf16.msra.mxu0 %v656
        %694 = vmatprep.subr.bf16.mxu0 0
        %695 = vmatpush1.bf16.msra.mxu0 %v657
        %696 = vmatprep.subr.bf16.mxu0 0
        %697 = vmatpush1.bf16.msra.mxu0 %v658
        %698 = vmatprep.subr.bf16.mxu0 0
        %699 = vmatpush1.bf16.msra.mxu0 0
        %700 = vmatprep.subr.bf16.mxu0 0
        %701 = vmatpush1.bf16.msra.mxu0 0
        %702 = vmatprep.subr.bf16.mxu0 0
        %703 = vmatpush1.bf16.msra.mxu0 0
        %704 = vmatprep.subr.bf16.mxu0 0
        %705 = vmatpush1.bf16.msra.mxu0 0
        %706 = vmatprep.mubr.bf16.mxu0 %v672
        %707 = vmatmul.mubr.bf16.gmra.mrb[0].mxu0 %v590
        %v708 = vpop.f32.mrb[0].mxu0
        %v709 = vadd.f32 %v582, %v708
        %v710 = vpop.f32.mrb[0].mxu0
        %v711 = vpop.f32.mrb[0].mxu0
        %v712 = vpop.f32.mrb[0].mxu0
        %713 = vdwg.mxu0
        %v714 = vmax.f32 %v709, 0.0
        %715 = vst [vmem:[#allocation5] sm:$0xff] %v714
        %v716 = vld [vmem:[#allocation5] ss:$2 sm:$0xf]
        %s717 = scalar_lea.vmem [#allocation5], 1
        %v718 = vld [vmem:[%s717] ss:$2 sm:$0xf]
        %v719 = vmax.f32 %v716, %v718
        %721 = vrot.lane.b32.xlu0 %v719, 64
        %v722 = vpop.permute.xlu0 %721
        %v724 = vmax.f32 %v719, %v722
        %v725 = vlaneseq
        %vm726 = vcmp.ge.s32.totalorder %v725, 0
        %vm727 = vcmp.lt.s32.totalorder %v725, 64
        %vm728 = vmand %vm726, %vm727
        %729 = vst.msk [vmem:[#allocation6] sm:$0x1] %vm728, %v724
        %v732 = vunpack.c.l.s4 1966171168
        %v733 = vunpack.c.0.s8 %v732
        %v734 = vlaneseq
        %v735 = vshrl.u32 %v734, 7
        %v736 = vsub.s32 %v733, %v735
        %v737 = vrot.slane %v724, %v736
        %v738 = vcombine.high %v737, %v737
        %v740 = vunpack.c.l.s4 1966171168
        %v741 = vunpack.c.0.s8 %v740
        %v742 = vlaneseq
        %v743 = vshrl.u32 %v742, 7
        %v744 = vsub.s32 %v741, %v743
        %v745 = vrot.slane %v737, %v744
        %v747 = vunpack.c.l.s4 1966171168
        %v748 = vunpack.c.0.s8 %v747
        %v749 = vlaneseq
        %v750 = vshrl.u32 %v749, 7
        %v751 = vsub.s32 %v748, %v750
        %v752 = vrot.slane %v738, %v751
        %753 = vrot.lane.b32.xlu0 %v752, 64
        %v754 = vpop.permute.xlu0 %753
        %vm756 = vcmp.ge.s32.totalorder %v725, 64
        %vm757 = vcmp.lt.s32.totalorder %v725, 128
        %vm758 = vmand %vm756, %vm757
        %759 = vst.msk [vmem:[#allocation6] sm:$0x1] %vm758, %v754
        %v760 = vcombine.high %v745, %v745
        %762 = vst.msk [vmem:[#allocation6 + $0x1] sm:$0x1] %vm728, %v760
        %v763 = vcombine.high %v752, %v752
        %764 = vrot.lane.b32.xlu0 %v763, 64
        %v765 = vpop.permute.xlu0 %764
        %767 = vst.msk [vmem:[#allocation6 + $0x1] sm:$0x1] %vm758, %v765
        %v768 = vld [vmem:[#allocation6] sm:$0x3]
        %v770 = vlaneseq
        %v771 = vshrl.u32 %v770, 7
        %v772 = vsub.s32 0, %v771
        %v773 = vrot.slane %v768, %v772
        %v774 = vlaneseq
        %v775 = vshrl.u32 %v774, 7
        %v776 = vsub.s32 1, %v775
        %v777 = vrot.slane %v768, %v776
        %v780 = vpack.c.bf16 %v773, %v773
        %v781 = vpack.c.bf16 %v777, %v777
        %v782 = vld [vmem:[%s5] sm:$0xf]
        %v783 = vld [vmem:[%s5 + $0x4] sm:$0xf]
        %v784 = vld [vmem:[%s5 + $0x8] sm:$0xf]
        %v785 = vld [vmem:[%s5 + $0xc] sm:$0xf]
        %v786 = vld [vmem:[%s5 + $0x10] sm:$0xf]
        %v787 = vld [vmem:[%s5 + $0x14] sm:$0xf]
        %v788 = vld [vmem:[%s5 + $0x18] sm:$0xf]
        %v789 = vld [vmem:[%s5 + $0x1c] sm:$0xf]
        %v790 = vld [vmem:[%s5 + $0x20] sm:$0xf]
        %v791 = vld [vmem:[%s5 + $0x24] sm:$0xf]
        %v792 = vld [vmem:[%s5 + $0x28] sm:$0xf]
        %v793 = vld [vmem:[%s5 + $0x2c] sm:$0xf]
        %v794 = vld [vmem:[%s5 + $0x30] sm:$0xf]
        %v795 = vld [vmem:[%s5 + $0x34] sm:$0xf]
        %v796 = vld [vmem:[%s5 + $0x38] sm:$0xf]
        %v797 = vld [vmem:[%s5 + $0x3c] sm:$0xf]
        %v798 = vld [vmem:[%s5 + $0x40] sm:$0xf]
        %v799 = vld [vmem:[%s5 + $0x44] sm:$0xf]
        %v800 = vld [vmem:[%s5 + $0x48] sm:$0xf]
        %v801 = vld [vmem:[%s5 + $0x4c] sm:$0xf]
        %v802 = vld [vmem:[%s5 + $0x50] sm:$0xf]
        %v803 = vld [vmem:[%s5 + $0x54] sm:$0xf]
        %v804 = vld [vmem:[%s5 + $0x58] sm:$0xf]
        %v805 = vld [vmem:[%s5 + $0x5c] sm:$0xf]
        %v806 = vld [vmem:[%s5 + $0x60] sm:$0xf]
        %v807 = vld [vmem:[%s5 + $0x64] sm:$0xf]
        %v808 = vld [vmem:[%s5 + $0x68] sm:$0xf]
        %v809 = vld [vmem:[%s5 + $0x6c] sm:$0xf]
        %v810 = vld [vmem:[%s5 + $0x70] sm:$0xf]
        %v811 = vld [vmem:[%s5 + $0x74] sm:$0xf]
        %v812 = vld [vmem:[%s5 + $0x78] sm:$0xf]
        %v813 = vld [vmem:[%s5 + $0x7c] sm:$0xf]
        %v814 = vld [vmem:[%s6] sm:$0x1]
        %v847 = vunpack.c.l.b16 %v782
        %v848 = vunpack.c.l.b16 %v783
        %v849 = vunpack.c.l.b16 %v784
        %v850 = vunpack.c.l.b16 %v785
        %v851 = vunpack.c.l.b16 %v786
        %v852 = vunpack.c.l.b16 %v787
        %v853 = vunpack.c.l.b16 %v788
        %v854 = vunpack.c.l.b16 %v789
        %v855 = vunpack.c.l.b16 %v790
        %v856 = vunpack.c.l.b16 %v791
        %v857 = vunpack.c.l.b16 %v792
        %v858 = vunpack.c.l.b16 %v793
        %v859 = vunpack.c.l.b16 %v794
        %v860 = vunpack.c.l.b16 %v795
        %v861 = vunpack.c.l.b16 %v796
        %v862 = vunpack.c.l.b16 %v797
        %v863 = vunpack.c.l.b16 %v798
        %v864 = vunpack.c.l.b16 %v799
        %v865 = vunpack.c.l.b16 %v800
        %v866 = vunpack.c.l.b16 %v801
        %v867 = vunpack.c.l.b16 %v802
        %v868 = vunpack.c.l.b16 %v803
        %v869 = vunpack.c.l.b16 %v804
        %v870 = vunpack.c.l.b16 %v805
        %v871 = vunpack.c.l.b16 %v806
        %v872 = vunpack.c.l.b16 %v807
        %v873 = vunpack.c.l.b16 %v808
        %v874 = vunpack.c.l.b16 %v809
        %v875 = vunpack.c.l.b16 %v810
        %v876 = vunpack.c.l.b16 %v811
        %v877 = vunpack.c.l.b16 %v812
        %v878 = vunpack.c.l.b16 %v813
        %v879 = vpack.c.b16 %v848, %v847
        %v880 = vpack.c.b16 %v850, %v849
        %v881 = vpack.c.b16 %v852, %v851
        %v882 = vpack.c.b16 %v854, %v853
        %v883 = vpack.c.b16 %v856, %v855
        %v884 = vpack.c.b16 %v858, %v857
        %v885 = vpack.c.b16 %v860, %v859
        %v886 = vpack.c.b16 %v862, %v861
        %v887 = vpack.c.b16 %v864, %v863
        %v888 = vpack.c.b16 %v866, %v865
        %v889 = vpack.c.b16 %v868, %v867
        %v890 = vpack.c.b16 %v870, %v869
        %v891 = vpack.c.b16 %v872, %v871
        %v892 = vpack.c.b16 %v874, %v873
        %v893 = vpack.c.b16 %v876, %v875
        %v894 = vpack.c.b16 %v878, %v877
        %911 = vmatprep.subr.bf16.mxu0 0
        %912 = vmatpush1.bf16.msra.mxu0 %v879
        %913 = vmatprep.subr.bf16.mxu0 0
        %914 = vmatpush1.bf16.msra.mxu0 %v880
        %915 = vmatprep.subr.bf16.mxu0 0
        %916 = vmatpush1.bf16.msra.mxu0 %v881
        %917 = vmatprep.subr.bf16.mxu0 0
        %918 = vmatpush1.bf16.msra.mxu0 %v882
        %919 = vmatprep.subr.bf16.mxu0 0
        %920 = vmatpush1.bf16.msra.mxu0 %v883
        %921 = vmatprep.subr.bf16.mxu0 0
        %922 = vmatpush1.bf16.msra.mxu0 %v884
        %923 = vmatprep.subr.bf16.mxu0 0
        %924 = vmatpush1.bf16.msra.mxu0 %v885
        %925 = vmatprep.subr.bf16.mxu0 0
        %926 = vmatpush1.bf16.msra.mxu0 %v886
        %927 = vmatprep.subr.bf16.mxu0 0
        %928 = vmatpush1.bf16.msra.mxu0 %v887
        %929 = vmatprep.subr.bf16.mxu0 0
        %930 = vmatpush1.bf16.msra.mxu0 %v888
        %931 = vmatprep.subr.bf16.mxu0 0
        %932 = vmatpush1.bf16.msra.mxu0 %v889
        %933 = vmatprep.subr.bf16.mxu0 0
        %934 = vmatpush1.bf16.msra.mxu0 %v890
        %935 = vmatprep.subr.bf16.mxu0 0
        %936 = vmatpush1.bf16.msra.mxu0 %v891
        %937 = vmatprep.subr.bf16.mxu0 0
        %938 = vmatpush1.bf16.msra.mxu0 %v892
        %939 = vmatprep.subr.bf16.mxu0 0
        %940 = vmatpush1.bf16.msra.mxu0 %v893
        %941 = vmatprep.subr.bf16.mxu0 0
        %942 = vmatpush1.bf16.msra.mxu0 %v894
        %943 = vmatprep.mubr.bf16.mxu0 %v781
        %944 = vmatmul.mubr.bf16.gmra.mrb[0].mxu0 %v780
        %v945 = vpop.f32.mrb[0].mxu0
        %v946 = vadd.f32 %v814, %v945
        %v947 = vpop.f32.mrb[0].mxu0
        %v948 = vpop.f32.mrb[0].mxu0
        %v949 = vpop.f32.mrb[0].mxu0
        %950 = vdwg.mxu0
        %vm951 = vcmask 253952
        %952 = vst.msk [vmem:[%s286] sm:$0x1] %vm951, %v946
        %s953 = sand.u32 %s182, 1
        %s954 = scalar_lea.sflag [#allocation9], %s953
        %s955 = sand.u32 %s182, 1
        %s956 = scalar_lea.vmem [#allocation10], %s955
        // Predicated region
        $region53: #{tpu_custom_call.1} parent=47 // pred_check
          %p957 = pneg %p192
        $region54: #{tpu_custom_call.1} parent=47 // pred_check_branch
          %959 = sbr.rel (%p957) target = $region56
        $region55: #{tpu_custom_call.1} parent=47 // pred_region
          %s961 = ssub.s32 16, 16
          %962 = vsyncadd %s954, %s961
          %s963 = smul.addr %s22, 16
          %s964 = scalar_lea.hbm %s7, %s963
          %s966 = sshll.u32 %s956, 4
          %s967 = int_to_ptr.vmem [resolvable:$true] %s966
          %969 = dma.vmem_to_hbm [thread:$0]  %s967, 16, %s964, %s954
        $region56: #{tpu_custom_call.1} parent=47 // pred_fallthru
          _
      $region48: #{tpu_custom_call.1} parent=5 // pred_fallthru
        _
      %p970 = scmp.le.s32.totalorder 2, %s17
      // Predicated region
      $region57: #{tpu_custom_call.1} parent=5 // pred_check
        %p971 = pneg %p970
      $region58: #{tpu_custom_call.1} parent=5 // pred_check_branch
        %973 = sbr.rel (%p971) target = $region60
      $region59: #{tpu_custom_call.1} parent=5 // pred_region
        %s974 = ssub.s32 %s17, 2
        // Predicated region
        $region61: #{tpu_custom_call.1} parent=59 // pred_check
          %p975 = pneg %p198
        $region62: #{tpu_custom_call.1} parent=59 // pred_check_branch
          %977 = sbr.rel (%p975) target = $region64
        $region63: #{tpu_custom_call.1} parent=59 // pred_region
          %s978 = sand.u32 %s183, 1
          %s979 = scalar_lea.sflag [#allocation9], %s978
          %s980 = sand.u32 %s183, 1
          %s981 = scalar_lea.vmem [#allocation10], %s980
          %982 = dma.done %s979, 16
        $region64: #{tpu_custom_call.1} parent=59 // pred_fallthru
          _
      $region60: #{tpu_custom_call.1} parent=5 // pred_fallthru
        _
    $region6: #{tpu_custom_call.1} parent=1 // loop_footer
      %s21 = sadd.s32 1, %s17
    $region7: #{tpu_custom_call.1} parent=1 // loop_footer_branch
      %16 = sbr.rel target = $region3
    $region8: #{tpu_custom_call.1} parent=1 // loop_exit
      _
    %983 = vsyncpa [#allocation8], 1
    %s984 = scalar_lea.sflag [#allocation8], 1
    %985 = vsyncpa %s984, 1
    %986 = vsyncpa [#allocation9], 1
    %s987 = scalar_lea.sflag [#allocation9], 1
    %988 = vsyncpa %s987, 1

</llo_original>
